<compile_context>
chip_gen: v7x
topology: tpu7x:2x2x1
jax: 0.10.0
libtpu: 0.0.40
codegen_flags: <defaults>
</compile_context>

<pallas_src>
import numpy as np
import jax
import jax.numpy as jnp
from jax.experimental import pallas as pl
from jax.experimental.pallas import tpu as pltpu

# ----------------------------- config -------------------------------------
MIN_LEVEL = 3
MAX_LEVEL = 5
NUM_LEVELS = MAX_LEVEL - MIN_LEVEL + 1
NUM_SCALES = 1
ASPECT_RATIOS = [(1.0, 1.0)]
ANCHOR_SCALE = 4.0
IMAGE_SIZE = 32
NUM_CLASSES = 8
NUM_ANCHORS = NUM_SCALES * len(ASPECT_RATIOS)     # anchors per location
C_IN = 4
BATCH = 2
MAX_DETECTION_POINTS = 16                          # small synthetic analogue of 5000

C_OUT = NUM_ANCHORS * NUM_CLASSES + NUM_ANCHORS * 4   # cls | box channels = 12
C_OUT_PAD = 128                                       # lane-dense output slab


def _round_up(v, m):
    return -(-v // m) * m


# ---------------- Pallas kernel 1: fused multi-level conv heads -------------
def _head_kernel(x_ref, w_ref, b_ref, o_ref):
    # x: (1, M_pad, C_in), w: (1, C_in, 128), b: (1, 1, 128) -> o: (1, M_pad, 128)
    o_ref[0] = (
        jnp.dot(x_ref[0], w_ref[0], preferred_element_type=jnp.float32)
        + b_ref[0]
    )


def fused_head(x_stack, w_stack, b_stack):
    """One pallas_call for all levels and both (cls, box) heads.

    x_stack: (L, M_pad, C_in); w_stack: (L, C_in, 128); b_stack: (L, 1, 128)
    """
    L, m_pad, cin = x_stack.shape
    cout = w_stack.shape[2]
    return pl.pallas_call(
        _head_kernel,
        out_shape=jax.ShapeDtypeStruct((L, m_pad, cout), jnp.float32),
        grid=(L,),
        in_specs=[
            pl.BlockSpec((1, m_pad, cin), lambda l: (l, 0, 0)),
            pl.BlockSpec((1, cin, cout), lambda l: (l, 0, 0)),
            pl.BlockSpec((1, 1, cout), lambda l: (l, 0, 0)),
        ],
        out_specs=pl.BlockSpec((1, m_pad, cout), lambda l: (l, 0, 0)),
        compiler_params=pltpu.CompilerParams(
            dimension_semantics=("parallel",)),   # lets v7x shard levels over 2 TCs
    )(x_stack, w_stack, b_stack)


# --------- Pallas kernel 2: batch-wide anchor decode + detection assembly ---
def _decode_kernel(box_ref, anc_ref, aux_ref, det_ref):
    # box_ref: (4, Npad) rows = [ty, tx, th, tw]         (coords on sublane axis)
    # anc_ref: (4, Npad) rows = [y1, x1, y2, x2]
    # aux_ref: (4, Npad) rows = [scale, cls_logit, class, image_id]
    # det_ref: (8, Npad) rows = [image_id, xmin, ymin, w, h, score, class, 0]
    ty, tx = box_ref[0:1, :], box_ref[1:2, :]
    th, tw = box_ref[2:3, :], box_ref[3:4, :]
    ya1, xa1 = anc_ref[0:1, :], anc_ref[1:2, :]
    ya2, xa2 = anc_ref[2:3, :], anc_ref[3:4, :]
    scale, logit = aux_ref[0:1, :], aux_ref[1:2, :]
    cls_f, img_id = aux_ref[2:3, :], aux_ref[3:4, :]

    ycenter_a = (ya1 + ya2) * 0.5
    xcenter_a = (xa1 + xa2) * 0.5
    ha = ya2 - ya1
    wa = xa2 - xa1

    w = jnp.exp(tw) * wa
    h = jnp.exp(th) * ha
    ycenter = ty * ha + ycenter_a
    xcenter = tx * wa + xcenter_a

    ymin = ycenter - h * 0.5
    xmin = xcenter - w * 0.5
    ymax = ycenter + h * 0.5
    xmax = xcenter + w * 0.5

    # sigmoid: exp on the EUP + approximate reciprocal on the EUP (VALU untouched)
    score = pl.reciprocal(1.0 + jnp.exp(-logit), approx=True)

    det_ref[...] = jnp.concatenate([
        img_id,
        xmin * scale,
        ymin * scale,
        (xmax - xmin) * scale,
        (ymax - ymin) * scale,
        score,
        cls_f,
        jnp.zeros_like(score),          # pad 7 -> 8 detection columns
    ], axis=0)


def decode_and_assemble(box_topk, anchors_g, cls_topk, classes, image_ids, image_scales):
    """box_topk/anchors: (B,K,4); cls_topk: (B,K,1); classes: (B,K) -> (B,K,7)."""
    B, K, _ = box_topk.shape
    N = B * K
    NPAD = _round_up(max(N, 128), 128)

    def to_rows(a):                                   # (B,K,4) -> (4, NPAD)
        t = a.reshape(N, 4).T
        return jnp.pad(t, ((0, 0), (0, NPAD - N)))

    box_t = to_rows(box_topk.astype(jnp.float32))
    anc_t = to_rows(anchors_g.astype(jnp.float32))

    scale_row = jnp.repeat(image_scales.astype(jnp.float32), K)
    logit_row = cls_topk.reshape(N).astype(jnp.float32)
    class_row = classes.reshape(N).astype(jnp.float32)
    id_row = jnp.repeat(image_ids.astype(jnp.float32), K)
    aux = jnp.pad(jnp.stack([scale_row, logit_row, class_row, id_row], axis=0),
                  ((0, 0), (0, NPAD - N)))

    det_t = pl.pallas_call(
        _decode_kernel,
        out_shape=jax.ShapeDtypeStruct((8, NPAD), jnp.float32),
        grid=(1,),
        in_specs=[
            pl.BlockSpec((4, NPAD), lambda i: (0, 0)),
            pl.BlockSpec((4, NPAD), lambda i: (0, 0)),
            pl.BlockSpec((4, NPAD), lambda i: (0, 0)),
        ],
        out_specs=pl.BlockSpec((8, NPAD), lambda i: (0, 0)),
    )(box_t, anc_t, aux)

    # layout plumbing only: back to (B, K, 7)
    return det_t[:, :N].T.reshape(B, K, 8)[:, :, :7]


# --------------------------- anchors (glue, numpy) --------------------------
def generate_anchor_boxes():
    boxes_all = []
    for level in range(MIN_LEVEL, MAX_LEVEL + 1):
        stride = 2 ** level
        boxes_level = []
        for scale_octave in range(NUM_SCALES):
            for aspect in ASPECT_RATIOS:
                octave_scale = scale_octave / float(NUM_SCALES)
                base = ANCHOR_SCALE * stride * (2 ** octave_scale)
                ax2 = base * aspect[0] / 2.0
                ay2 = base * aspect[1] / 2.0
                x = np.arange(stride / 2.0, IMAGE_SIZE, stride)
                y = np.arange(stride / 2.0, IMAGE_SIZE, stride)
                xv, yv = np.meshgrid(x, y)
                xv, yv = xv.reshape(-1), yv.reshape(-1)
                boxes = np.vstack((yv - ay2, xv - ax2, yv + ay2, xv + ax2)).T
                boxes_level.append(boxes[:, None, :])
        boxes_level = np.concatenate(boxes_level, axis=1).reshape(-1, 4)
        boxes_all.append(boxes_level)
    return jnp.asarray(np.vstack(boxes_all), dtype=jnp.float32)


# ------------------------ synthetic multi-level model -----------------------
def make_params(key):
    params = []
    for _ in range(NUM_LEVELS):
        key, k1, k2, k3, k4 = jax.random.split(key, 5)
        params.append(dict(
            cls_w=0.1 * jax.random.normal(k1, (C_IN, NUM_ANCHORS * NUM_CLASSES), jnp.float32),
            cls_b=0.1 * jax.random.normal(k2, (NUM_ANCHORS * NUM_CLASSES,), jnp.float32),
            box_w=0.1 * jax.random.normal(k3, (C_IN, NUM_ANCHORS * 4), jnp.float32),
            box_b=0.1 * jax.random.normal(k4, (NUM_ANCHORS * 4,), jnp.float32),
        ))
    return params


def build_head_inputs(x, params):
    """Stack all levels into one fused-head input set (glue reshapes only)."""
    B, C, H, W = x.shape
    m_max = B * (H // (2 ** MIN_LEVEL)) * (W // (2 ** MIN_LEVEL))
    m_pad = _round_up(m_max, 8)

    xs, meta = [], []
    for li in range(NUM_LEVELS):
        f = 2 ** (MIN_LEVEL + li)
        hs, ws = H // f, W // f
        feat = x.reshape(B, C, hs, f, ws, f).mean(axis=(3, 5))          # avg-pool (glue)
        rows = jnp.transpose(feat, (0, 2, 3, 1)).reshape(B * hs * ws, C)  # NHWC rows
        m = rows.shape[0]
        xs.append(jnp.pad(rows, ((0, m_pad - m), (0, 0))))
        meta.append((hs, ws, m))
    x_stack = jnp.stack(xs, axis=0)                                     # (L, m_pad, C_in)

    w_list, b_list = [], []
    for p in params:
        w = jnp.concatenate([p["cls_w"], p["box_w"]], axis=1)           # (C_in, 12)
        b = jnp.concatenate([p["cls_b"], p["box_b"]], axis=0)           # (12,)
        w_list.append(jnp.pad(w, ((0, 0), (0, C_OUT_PAD - C_OUT))))
        b_list.append(jnp.pad(b, (0, C_OUT_PAD - C_OUT))[None, :])
    w_stack = jnp.stack(w_list, axis=0)                                 # (L, C_in, 128)
    b_stack = jnp.stack(b_list, axis=0)                                 # (L, 1, 128)
    return x_stack, w_stack, b_stack, meta


def synthetic_model(x, params):
    """Returns per-level NHWC cls / box head outputs (== torch NCHW after the
    permute(0,2,3,1) that _post_process immediately applies)."""
    x_stack, w_stack, b_stack, meta = build_head_inputs(x, params)
    head_out = fused_head(x_stack, w_stack, b_stack)                    # (L, m_pad, 128)

    B = x.shape[0]
    ncls = NUM_ANCHORS * NUM_CLASSES
    cls_outs, box_outs = [], []
    for li, (hs, ws, m) in enumerate(meta):
        o = head_out[li, :m, :C_OUT]
        cls_outs.append(o[:, :ncls].reshape(B, hs, ws, ncls))
        box_outs.append(o[:, ncls:].reshape(B, hs, ws, NUM_ANCHORS * 4))
    return cls_outs, box_outs


# ------------------------------ _post_process -------------------------------
def post_process(cls_outputs, box_outputs):
    B = cls_outputs[0].shape[0]
    cls_all = jnp.concatenate(
        [c.reshape(B, -1, NUM_CLASSES) for c in cls_outputs], axis=1)
    box_all = jnp.concatenate(
        [b.reshape(B, -1, 4) for b in box_outputs], axis=1)

    flat = cls_all.reshape(B, -1)
    _, topk_idx = jax.lax.top_k(flat, MAX_DETECTION_POINTS)
    indices = topk_idx // NUM_CLASSES
    classes = topk_idx % NUM_CLASSES

    box_topk = jnp.take_along_axis(box_all, indices[..., None], axis=1)        # (B,K,4)
    cls_gathered = jnp.take_along_axis(cls_all, indices[..., None], axis=1)    # (B,K,C)
    cls_topk = jnp.take_along_axis(cls_gathered, classes[..., None], axis=2)   # (B,K,1)
    return cls_topk, box_topk, indices, classes


# --------------------------- DetBenchEval.forward ---------------------------
def det_bench_eval_forward(x, image_ids, image_scales, params, anchor_boxes):
    cls_outs, box_outs = synthetic_model(x, params)
    cls_topk, box_topk, indices, classes = post_process(cls_outs, box_outs)

    anchors_gathered = anchor_boxes[indices]                                   # (B,K,4)
    det = decode_and_assemble(box_topk, anchors_gathered, cls_topk, classes,
                              image_ids, image_scales)                         # (B,K,7)

    # TODO(synk): per-class NMS inside generate_detections has no clean Pallas
    # equivalent; detections are returned pre-NMS (top MAX_DETECTION_POINTS).
    return [det[i] for i in range(det.shape[0])]


# ---------------------------------- main ------------------------------------
if __name__ == "__main__":
    key = jax.random.PRNGKey(0)
    key, kx, kp = jax.random.split(key, 3)

    x = jax.random.normal(kx, (BATCH, C_IN, IMAGE_SIZE, IMAGE_SIZE), jnp.float32)
    image_ids = jnp.arange(BATCH, dtype=jnp.float32)
    image_scales = jnp.array([1.5, 0.75], dtype=jnp.float32)

    params = make_params(kp)
    anchor_boxes = generate_anchor_boxes()   # (total_anchors, 4) [y1,x1,y2,x2]

    dets = det_bench_eval_forward(x, image_ids, image_scales, params, anchor_boxes)
    dets = jax.block_until_ready(dets)

    assert len(dets) == BATCH
    for d in dets:
        assert d.shape == (MAX_DETECTION_POINTS, 7)
        assert bool(jnp.all(jnp.isfinite(d)))
    print("KERNEL_OK")
</pallas_src>

<mosaic_0001>
module attributes {stable_mosaic.version = 11 : i64} {
  func.func @_head_kernel(%arg0: i32, %arg1: memref<1x32x4xf32, #tpu.memory_space<vmem>>, %arg2: memref<1x4x128xf32, #tpu.memory_space<vmem>>, %arg3: memref<1x1x128xf32, #tpu.memory_space<vmem>>, %arg4: memref<1x32x128xf32, #tpu.memory_space<vmem>>) attributes {dimension_semantics = [#tpu.dimension_semantics<parallel>], iteration_bounds = array<i64: 3>, scalar_prefetch = 0 : i64, scratch_operands = 0 : i64, tpu.core_type = #tpu.core_type<tc>, window_params = [{transform_indices = @transform_0, window_bounds = array<i64: 1, 32, 4>}, {transform_indices = @transform_1, window_bounds = array<i64: 1, 4, 128>}, {transform_indices = @transform_2, window_bounds = array<i64: 1, 1, 128>}, {transform_indices = @transform_3, window_bounds = array<i64: 1, 32, 128>}]} {
    %c0 = arith.constant 0 : index
    %c0_0 = arith.constant 0 : index
    %c0_1 = arith.constant 0 : index
    %0 = vector.load %arg1[%c0, %c0_0, %c0_1] : memref<1x32x4xf32, #tpu.memory_space<vmem>>, vector<1x32x4xf32>
    %1 = vector.shape_cast %0 : vector<1x32x4xf32> to vector<32x4xf32>
    %c0_2 = arith.constant 0 : index
    %c0_3 = arith.constant 0 : index
    %c0_4 = arith.constant 0 : index
    %2 = vector.load %arg2[%c0_2, %c0_3, %c0_4] : memref<1x4x128xf32, #tpu.memory_space<vmem>>, vector<1x4x128xf32>
    %3 = vector.shape_cast %2 : vector<1x4x128xf32> to vector<4x128xf32>
    %cst = arith.constant dense<0.000000e+00> : vector<32x128xf32>
    %4 = tpu.matmul %1, %3, %cst {dimension_numbers = #tpu.dot_dimension_numbers<[1], [0], [0], [1], [0, 0, 1, 1], [], []>} : vector<32x4xf32>, vector<4x128xf32>, vector<32x128xf32> -> vector<32x128xf32>
    %c0_5 = arith.constant 0 : index
    %c0_6 = arith.constant 0 : index
    %c0_7 = arith.constant 0 : index
    %5 = vector.load %arg3[%c0_5, %c0_6, %c0_7] : memref<1x1x128xf32, #tpu.memory_space<vmem>>, vector<1x1x128xf32>
    %6 = vector.shape_cast %5 : vector<1x1x128xf32> to vector<1x128xf32>
    %7 = vector.broadcast %6 : vector<1x128xf32> to vector<32x128xf32>
    %8 = arith.addf %4, %7 : vector<32x128xf32>
    %c0_8 = arith.constant 0 : index
    %c0_9 = arith.constant 0 : index
    %c0_10 = arith.constant 0 : index
    %9 = vector.load %arg4[%c0_8, %c0_9, %c0_10] : memref<1x32x128xf32, #tpu.memory_space<vmem>>, vector<1x32x128xf32>
    %10 = vector.shape_cast %9 : vector<1x32x128xf32> to vector<32x128xf32>
    %11 = vector.shape_cast %8 : vector<32x128xf32> to vector<1x32x128xf32>
    tpu.vector_store %arg4[%c0_8, %c0_9, %c0_10], %11 {strides = array<i32>} : memref<1x32x128xf32, #tpu.memory_space<vmem>>, vector<1x32x128xf32>,
    return
  }
  func.func @transform_0(%arg0: i32) -> (i32, i32, i32) {
    %c0_i32 = arith.constant 0 : i32
    %c0_i32_0 = arith.constant 0 : i32
    %c0_i32_1 = arith.constant 0 : i32
    return %arg0, %c0_i32, %c0_i32_0 : i32, i32, i32
  }
  func.func @transform_1(%arg0: i32) -> (i32, i32, i32) {
    %c0_i32 = arith.constant 0 : i32
    %c0_i32_0 = arith.constant 0 : i32
    %c0_i32_1 = arith.constant 0 : i32
    return %arg0, %c0_i32, %c0_i32_0 : i32, i32, i32
  }
  func.func @transform_2(%arg0: i32) -> (i32, i32, i32) {
    %c0_i32 = arith.constant 0 : i32
    %c0_i32_0 = arith.constant 0 : i32
    %c0_i32_1 = arith.constant 0 : i32
    return %arg0, %c0_i32, %c0_i32_0 : i32, i32, i32
  }
  func.func @transform_3(%arg0: i32) -> (i32, i32, i32) {
    %c0_i32 = arith.constant 0 : i32
    %c0_i32_0 = arith.constant 0 : i32
    %c0_i32_1 = arith.constant 0 : i32
    return %arg0, %c0_i32, %c0_i32_0 : i32, i32, i32
  }
}

</mosaic_0001>

<llo_original>
// kernel: tpu_custom_call.1
$region0: #{tpu_custom_call.1}
  #allocation0 [shape = 'u32[]', space=smem, size = 0x4, offset = 0x4, fixed_abs, tag = 'smem constant byte address 0x4 - core index']
  #allocation1 [shape = 'u32[144,128]{1,0:T(1,128)}', space=vmem, size = 0x12000, scoped, tag = 'internal scratch']
  %s0 = inlined_call_operand.vmem [shape: f32[3,32,4], index: 0, kind: input, shape index: {}]
  %s1 = inlined_call_operand.vmem [shape: f32[3,4,128], index: 1, kind: input, shape index: {}]
  %s2 = inlined_call_operand.vmem [shape: f32[3,1,128], index: 2, kind: input, shape index: {}]
  %s3 = inlined_call_operand.hbm [shape: f32[3,32,128], index: 3, kind: output, shape index: {}]
  %s4 = sld [smem:[#allocation0]]
  $region45: #{tpu_custom_call.1} parent=0
    _
  %s6 = ssub.s32 1, %s4
  %s7 = scalar_select 0, %s6, %s4
  $region1: #{tpu_custom_call.1} parent=0
    #allocation2 [shape = 'u8[32768]{0}', space=vmem, size = 0x8000, scoped, tag = 'output window, operand 0']
    #allocation3 [shape = 's32[2]{0}', space=sflag, size = 0x8, scoped, tag = 'scoped memory for tpu_custom_call.1']
    %8 = vsyncpa [#allocation3], 0
    %s9 = scalar_lea.sflag [#allocation3], 1
    %10 = vsyncpa %s9, 0
    loop: start=0, step=1, limit=5
    $region2: #{tpu_custom_call.1} parent=1 // loop_pre_header
      _
    $region3: #{tpu_custom_call.1} parent=1 // loop_header
      %s12 = sphi 0, %s16
      %p13 = scmp.ge.s32.totalorder %s12, 5
      %s22 = sphi 0, %s24
      %s25 = sphi 0, %s22
      %s26 = sphi 0, %s25
      %s42 = sphi 0, %s26
      %s48 = sphi 0, %s50
      %s51 = sphi 0, %s48
      %s52 = sphi 0, %s51
      %s68 = sphi 0, %s52
      %s74 = sphi 0, %s76
      %s77 = sphi 0, %s74
      %s78 = sphi 0, %s77
      %s94 = sphi 0, %s78
      %s100 = sphi 0, %s102
      %s103 = sphi 0, %s100
      %s104 = sphi 0, %s103
      %s120 = sphi 0, %s104
    $region4: #{tpu_custom_call.1} parent=1 // loop_header_branch
      %15 = sbr.rel (%p13) target = $region8
    $region5: #{tpu_custom_call.1} parent=1 // loop_body
      %s17 = ssub.s32 %s12, 1
      %s18 = ssub.s32 %s12, 2
      %s19 = sadd.s32 %s12, 1
      %s20 = ssub.s32 %s12, %s19
      %p21 = scmp.eq.s32.totalorder %s20, 0
      %s23 = sadd.s32 %s22, 1
      %s24 = scalar_select %p21, %s22, %s23
      %p27 = pneg %p21
      %p28 = scmp.eq.s32.totalorder %s12, 2
      %p29 = por %p27, %p28
      %p30 = scmp.ne.s32.totalorder %s22, %s25
      %p31 = scmp.eq.s32.totalorder %s12, 0
      %p32 = por %p30, %p31
      %p33 = scmp.ne.s32.totalorder %s22, %s25
      %p34 = scmp.eq.s32.totalorder %s17, 2
      %p35 = por %p33, %p34
      %p36 = scmp.ne.s32.totalorder %s25, %s26
      %p37 = scmp.eq.s32.totalorder %s17, 0
      %p38 = por %p36, %p37
      %p39 = scmp.ne.s32.totalorder %s25, %s26
      %p40 = scmp.eq.s32.totalorder %s18, 2
      %p41 = por %p39, %p40
      %p43 = scmp.ne.s32.totalorder %s26, %s42
      %p44 = scmp.eq.s32.totalorder %s18, 0
      %p45 = por %p43, %p44
      %s46 = ssub.s32 %s12, %s19
      %p47 = scmp.eq.s32.totalorder %s46, 0
      %s49 = sadd.s32 %s48, 1
      %s50 = scalar_select %p47, %s48, %s49
      %p53 = pneg %p47
      %p54 = scmp.eq.s32.totalorder %s12, 2
      %p55 = por %p53, %p54
      %p56 = scmp.ne.s32.totalorder %s48, %s51
      %p57 = scmp.eq.s32.totalorder %s12, 0
      %p58 = por %p56, %p57
      %p59 = scmp.ne.s32.totalorder %s48, %s51
      %p60 = scmp.eq.s32.totalorder %s17, 2
      %p61 = por %p59, %p60
      %p62 = scmp.ne.s32.totalorder %s51, %s52
      %p63 = scmp.eq.s32.totalorder %s17, 0
      %p64 = por %p62, %p63
      %p65 = scmp.ne.s32.totalorder %s51, %s52
      %p66 = scmp.eq.s32.totalorder %s18, 2
      %p67 = por %p65, %p66
      %p69 = scmp.ne.s32.totalorder %s52, %s68
      %p70 = scmp.eq.s32.totalorder %s18, 0
      %p71 = por %p69, %p70
      %s72 = ssub.s32 %s12, %s19
      %p73 = scmp.eq.s32.totalorder %s72, 0
      %s75 = sadd.s32 %s74, 1
      %s76 = scalar_select %p73, %s74, %s75
      %p79 = pneg %p73
      %p80 = scmp.eq.s32.totalorder %s12, 2
      %p81 = por %p79, %p80
      %p82 = scmp.ne.s32.totalorder %s74, %s77
      %p83 = scmp.eq.s32.totalorder %s12, 0
      %p84 = por %p82, %p83
      %p85 = scmp.ne.s32.totalorder %s74, %s77
      %p86 = scmp.eq.s32.totalorder %s17, 2
      %p87 = por %p85, %p86
      %p88 = scmp.ne.s32.totalorder %s77, %s78
      %p89 = scmp.eq.s32.totalorder %s17, 0
      %p90 = por %p88, %p89
      %p91 = scmp.ne.s32.totalorder %s77, %s78
      %p92 = scmp.eq.s32.totalorder %s18, 2
      %p93 = por %p91, %p92
      %p95 = scmp.ne.s32.totalorder %s78, %s94
      %p96 = scmp.eq.s32.totalorder %s18, 0
      %p97 = por %p95, %p96
      %s98 = ssub.s32 %s12, %s19
      %p99 = scmp.eq.s32.totalorder %s98, 0
      %s101 = sadd.s32 %s100, 1
      %s102 = scalar_select %p99, %s100, %s101
      %p105 = pneg %p99
      %p106 = scmp.eq.s32.totalorder %s12, 2
      %p107 = por %p105, %p106
      %p108 = scmp.ne.s32.totalorder %s100, %s103
      %p109 = scmp.eq.s32.totalorder %s12, 0
      %p110 = por %p108, %p109
      %p111 = scmp.ne.s32.totalorder %s100, %s103
      %p112 = scmp.eq.s32.totalorder %s17, 2
      %p113 = por %p111, %p112
      %p114 = scmp.ne.s32.totalorder %s103, %s104
      %p115 = scmp.eq.s32.totalorder %s17, 0
      %p116 = por %p114, %p115
      %p117 = scmp.ne.s32.totalorder %s103, %s104
      %p118 = scmp.eq.s32.totalorder %s18, 2
      %p119 = por %p117, %p118
      %p121 = scmp.ne.s32.totalorder %s104, %s120
      %p122 = scmp.eq.s32.totalorder %s18, 0
      %p123 = por %p121, %p122
      %p124 = scmp.le.s32.totalorder 1, %s12
      %p125 = scmp.lt.s32.totalorder %s12, 4
      %p126 = pnand %p124, %p125
      %p127 = pneg %p126
      // Predicated region
      $region9: #{tpu_custom_call.1} parent=5 // pred_check
        _
      $region10: #{tpu_custom_call.1} parent=5 // pred_check_branch
        %129 = sbr.rel (%p126) target = $region12
      $region11: #{tpu_custom_call.1} parent=5 // pred_region
        %s130 = ssub.s32 %s12, 1
      $region12: #{tpu_custom_call.1} parent=5 // pred_fallthru
        _
      %p131 = scmp.lt.s32.totalorder %s12, 3
      // Predicated region
      $region13: #{tpu_custom_call.1} parent=5 // pred_check
        %p132 = pneg %p131
      $region14: #{tpu_custom_call.1} parent=5 // pred_check_branch
        %134 = sbr.rel (%p132) target = $region16
      $region15: #{tpu_custom_call.1} parent=5 // pred_region
        // Predicated region
        $region17: #{tpu_custom_call.1} parent=15 // pred_check
          %p135 = pneg %p32
        $region18: #{tpu_custom_call.1} parent=15 // pred_check_branch
          %137 = sbr.rel (%p135) target = $region20
        $region19: #{tpu_custom_call.1} parent=15 // pred_region
          %p138 = scmp.lt.s32.totalorder %s12, 2
          %s139 = scalar_select %p138, %s12, 2
          %s140 = smul.addr %s139, 4
          %s141 = smul.addr %s140, 8
          %s142 = scalar_lea.vmem %s0, %s141
        $region20: #{tpu_custom_call.1} parent=15 // pred_fallthru
          _
        // Predicated region
        $region21: #{tpu_custom_call.1} parent=15 // pred_check
          %p143 = pneg %p58
        $region22: #{tpu_custom_call.1} parent=15 // pred_check_branch
          %145 = sbr.rel (%p143) target = $region24
        $region23: #{tpu_custom_call.1} parent=15 // pred_region
          %p146 = scmp.lt.s32.totalorder %s12, 2
          %s147 = scalar_select %p146, %s12, 2
          %s148 = smul.addr %s147, 4
          %s149 = scalar_lea.vmem %s1, %s148
        $region24: #{tpu_custom_call.1} parent=15 // pred_fallthru
          _
        // Predicated region
        $region25: #{tpu_custom_call.1} parent=15 // pred_check
          %p150 = pneg %p84
        $region26: #{tpu_custom_call.1} parent=15 // pred_check_branch
          %152 = sbr.rel (%p150) target = $region28
        $region27: #{tpu_custom_call.1} parent=15 // pred_region
          %p153 = scmp.lt.s32.totalorder %s12, 2
          %s154 = scalar_select %p153, %s12, 2
          %s155 = scalar_lea.vmem %s2, %s154
        $region28: #{tpu_custom_call.1} parent=15 // pred_fallthru
          _
      $region16: #{tpu_custom_call.1} parent=5 // pred_fallthru
        _
      %p156 = scmp.le.s32.totalorder 1, %s12
      %p157 = scmp.lt.s32.totalorder %s12, 4
      %p158 = pnand %p156, %p157
      %p159 = pneg %p158
      // Predicated region
      $region29: #{tpu_custom_call.1} parent=5 // pred_check
        _
      $region30: #{tpu_custom_call.1} parent=5 // pred_check_branch
        %161 = sbr.rel (%p158) target = $region32
      $region31: #{tpu_custom_call.1} parent=5 // pred_region
        %s162 = ssub.s32 %s12, 1
        %p163 = scmp.lt.s32.totalorder %s17, 2
        %s164 = scalar_select %p163, %s17, 2
        %s165 = smul.addr %s164, 4
        %s166 = smul.addr %s165, 8
        %s167 = scalar_lea.vmem %s0, %s166
        %p168 = pneg %p38
        %p169 = pneg %p35
        %p170 = scmp.lt.s32.totalorder %s17, 2
        %s171 = scalar_select %p170, %s17, 2
        %s172 = smul.addr %s171, 4
        %s173 = scalar_lea.vmem %s1, %s172
        %p174 = pneg %p64
        %p175 = pneg %p61
        %p176 = scmp.lt.s32.totalorder %s17, 2
        %s177 = scalar_select %p176, %s17, 2
        %s178 = scalar_lea.vmem %s2, %s177
        %p179 = pneg %p90
        %p180 = pneg %p87
        %p181 = pneg %p116
        %p182 = pneg %p113
        %s183 = sand.u32 %s103, 1
        %s184 = scalar_lea.sflag [#allocation3], %s183
        %s185 = sand.u32 %s103, 1
        %s186 = smul.addr %s185, 32
        %s187 = scalar_lea.vmem [#allocation2], %s186
        %p188 = scmp.lt.s32.totalorder %s17, 2
        %s189 = scalar_select %p188, %s17, 2
        %s190 = smul.addr %s189, 4
        %s191 = smul.addr %s190, 8
        %s192 = scalar_lea.vmem %s0, %s191
        %p193 = scmp.lt.s32.totalorder %s17, 2
        %s194 = scalar_select %p193, %s17, 2
        %s195 = smul.addr %s194, 4
        %s196 = scalar_lea.vmem %s1, %s195
        %p197 = scmp.lt.s32.totalorder %s17, 2
        %s198 = scalar_select %p197, %s17, 2
        %s199 = scalar_lea.vmem %s2, %s198
        %v200 = vld [vmem:[%s192] sm:$0xff]
        %v201 = vld [vmem:[%s192 + $0x8] sm:$0xff]
        %v202 = vld [vmem:[%s192 + $0x10] sm:$0xff]
        %v203 = vld [vmem:[%s192 + $0x18] sm:$0xff]
        %v204 = vld [vmem:[%s196] sm:$0xf]
        %v205 = vld [vmem:[%s199] sm:$0x1]
        %v207 = vlaneseq
        %v208 = vshrl.u32 %v207, 7
        %v209 = vsub.s32 0, %v208
        %v210 = vrot.slane %v205, %v209
        %vm212 = vcmask 31744
        %v214 = vsel %vm212, %v200, 0
        %v217 = vsel %vm212, %v201, 0
        %v220 = vsel %vm212, %v202, 0
        %v223 = vsel %vm212, %v203, 0
        %vm225 = vcmask 1043456
        %v227 = vsel %vm225, %v204, 0
        %229 = vmatprep.subr.mxu0 0.0
        %230 = vmatpush1.msra.mxu0 %v227
        %231 = vmatprep.subr.mxu0 0.0
        %232 = vmatpush1.msra.mxu0 0.0
        %233 = vmatprep.subr.mxu0 0.0
        %234 = vmatpush1.msra.mxu0 0.0
        %235 = vmatprep.subr.mxu0 0.0
        %236 = vmatpush1.msra.mxu0 0.0
        %237 = vmatprep.subr.mxu0 0.0
        %238 = vmatpush1.msra.mxu0 0.0
        %239 = vmatprep.subr.mxu0 0.0
        %240 = vmatpush1.msra.mxu0 0.0
        %241 = vmatprep.subr.mxu0 0.0
        %242 = vmatpush1.msra.mxu0 0.0
        %243 = vmatprep.subr.mxu0 0.0
        %244 = vmatpush1.msra.mxu0 0.0
        %245 = vmatprep.subr.mxu0 0.0
        %246 = vmatpush1.msra.mxu0 0.0
        %247 = vmatprep.subr.mxu0 0.0
        %248 = vmatpush1.msra.mxu0 0.0
        %249 = vmatprep.subr.mxu0 0.0
        %250 = vmatpush1.msra.mxu0 0.0
        %251 = vmatprep.subr.mxu0 0.0
        %252 = vmatpush1.msra.mxu0 0.0
        %253 = vmatprep.subr.mxu0 0.0
        %254 = vmatpush1.msra.mxu0 0.0
        %255 = vmatprep.subr.mxu0 0.0
        %256 = vmatpush1.msra.mxu0 0.0
        %257 = vmatprep.subr.mxu0 0.0
        %258 = vmatpush1.msra.mxu0 0.0
        %259 = vmatprep.subr.mxu0 0.0
        %260 = vmatpush1.msra.mxu0 0.0
        %261 = vmatprep.subr.mxu0 0.0
        %262 = vmatpush1.msra.mxu0 0.0
        %263 = vmatprep.subr.mxu0 0.0
        %264 = vmatpush1.msra.mxu0 0.0
        %265 = vmatprep.subr.mxu0 0.0
        %266 = vmatpush1.msra.mxu0 0.0
        %267 = vmatprep.subr.mxu0 0.0
        %268 = vmatpush1.msra.mxu0 0.0
        %269 = vmatprep.subr.mxu0 0.0
        %270 = vmatpush1.msra.mxu0 0.0
        %271 = vmatprep.subr.mxu0 0.0
        %272 = vmatpush1.msra.mxu0 0.0
        %273 = vmatprep.subr.mxu0 0.0
        %274 = vmatpush1.msra.mxu0 0.0
        %275 = vmatprep.subr.mxu0 0.0
        %276 = vmatpush1.msra.mxu0 0.0
        %277 = vmatprep.subr.mxu0 0.0
        %278 = vmatpush1.msra.mxu0 0.0
        %279 = vmatprep.subr.mxu0 0.0
        %280 = vmatpush1.msra.mxu0 0.0
        %281 = vmatprep.subr.mxu0 0.0
        %282 = vmatpush1.msra.mxu0 0.0
        %283 = vmatprep.subr.mxu0 0.0
        %284 = vmatpush1.msra.mxu0 0.0
        %285 = vmatprep.subr.mxu0 0.0
        %286 = vmatpush1.msra.mxu0 0.0
        %287 = vmatprep.subr.mxu0 0.0
        %288 = vmatpush1.msra.mxu0 0.0
        %289 = vmatprep.subr.mxu0 0.0
        %290 = vmatpush1.msra.mxu0 0.0
        %291 = vmatprep.subr.mxu0 0.0
        %292 = vmatpush1.msra.mxu0 0.0
        %293 = vmatprep.mubr.f32.mxu0 0.0
        %294 = vmatmul.mubr.f32.gmra.mrb[0].mxu0 %v214
        %v295 = vpop.f32.mrb[0].mxu0
        %v296 = vadd.f32 %v210, %v295
        %v297 = vpop.f32.mrb[0].mxu0
        %298 = vmatprep.mubr.f32.mxu0 0.0
        %299 = vmatmul.mubr.f32.gmra.mrb[0].mxu0 %v217
        %v300 = vpop.f32.mrb[0].mxu0
        %v301 = vadd.f32 %v210, %v300
        %v302 = vpop.f32.mrb[0].mxu0
        %303 = vmatprep.mubr.f32.mxu0 0.0
        %304 = vmatmul.mubr.f32.gmra.mrb[0].mxu0 %v220
        %v305 = vpop.f32.mrb[0].mxu0
        %v306 = vadd.f32 %v210, %v305
        %v307 = vpop.f32.mrb[0].mxu0
        %308 = vmatprep.mubr.f32.mxu0 0.0
        %309 = vmatmul.mubr.f32.gmra.mrb[0].mxu0 %v223
        %v310 = vpop.f32.mrb[0].mxu0
        %v311 = vadd.f32 %v210, %v310
        %v312 = vpop.f32.mrb[0].mxu0
        %313 = vdwg.mxu0
        %314 = vst [vmem:[%s187] sm:$0xff] %v296
        %315 = vst [vmem:[%s187 + $0x8] sm:$0xff] %v301
        %316 = vst [vmem:[%s187 + $0x10] sm:$0xff] %v306
        %317 = vst [vmem:[%s187 + $0x18] sm:$0xff] %v311
        %s318 = sand.u32 %s103, 1
        %s319 = scalar_lea.sflag [#allocation3], %s318
        %s320 = sand.u32 %s103, 1
        %s321 = smul.addr %s320, 32
        %s322 = scalar_lea.vmem [#allocation2], %s321
        // Predicated region
        $region33: #{tpu_custom_call.1} parent=31 // pred_check
          %p323 = pneg %p113
        $region34: #{tpu_custom_call.1} parent=31 // pred_check_branch
          %325 = sbr.rel (%p323) target = $region36
        $region35: #{tpu_custom_call.1} parent=31 // pred_region
          %s327 = ssub.s32 512, 512
          %328 = vsyncadd %s319, %s327
          %s329 = smul.addr %s17, 4
          %s330 = smul.addr %s329, 128
          %s331 = scalar_lea.hbm %s3, %s330
          %s332 = sshll.u32 %s322, 4
          %s333 = int_to_ptr.vmem [resolvable:$true] %s332
          %338 = dma.vmem_to_hbm [thread:$0]  %s333, 512, %s331, %s319, 128, 128, 8
        $region36: #{tpu_custom_call.1} parent=31 // pred_fallthru
          _
      $region32: #{tpu_custom_call.1} parent=5 // pred_fallthru
        _
      %p339 = scmp.le.s32.totalorder 2, %s12
      // Predicated region
      $region37: #{tpu_custom_call.1} parent=5 // pred_check
        %p340 = pneg %p339
      $region38: #{tpu_custom_call.1} parent=5 // pred_check_branch
        %342 = sbr.rel (%p340) target = $region40
      $region39: #{tpu_custom_call.1} parent=5 // pred_region
        %s343 = ssub.s32 %s12, 2
        // Predicated region
        $region41: #{tpu_custom_call.1} parent=39 // pred_check
          %p344 = pneg %p119
        $region42: #{tpu_custom_call.1} parent=39 // pred_check_branch
          %346 = sbr.rel (%p344) target = $region44
        $region43: #{tpu_custom_call.1} parent=39 // pred_region
          %s347 = sand.u32 %s104, 1
          %s348 = scalar_lea.sflag [#allocation3], %s347
          %s349 = sand.u32 %s104, 1
          %s350 = smul.addr %s349, 32
          %s351 = scalar_lea.vmem [#allocation2], %s350
          %352 = dma.done %s348, 512
        $region44: #{tpu_custom_call.1} parent=39 // pred_fallthru
          _
      $region40: #{tpu_custom_call.1} parent=5 // pred_fallthru
        _
    $region6: #{tpu_custom_call.1} parent=1 // loop_footer
      %s16 = sadd.s32 1, %s12
    $region7: #{tpu_custom_call.1} parent=1 // loop_footer_branch
      %11 = sbr.rel target = $region3
    $region8: #{tpu_custom_call.1} parent=1 // loop_exit
      _
    %353 = vsyncpa [#allocation3], 1
    %s354 = scalar_lea.sflag [#allocation3], 1
    %355 = vsyncpa %s354, 1

</llo_original>
